<compile_context>
chip_gen: v6e
topology: v6e:2x2x1
jax: 0.10.0
libtpu: 0.0.40
codegen_flags: <defaults>
</compile_context>

<pallas_src>
import math

import jax
import jax.numpy as jnp
from jax import lax
from jax.experimental import pallas as pl
from jax.experimental.pallas import tpu as pltpu


# ----------------------------- config ---------------------------------------
B = 2            # batch
S = 8            # sequence length
H = 32           # hidden_size
NH = 4           # multi_head
DH = H // NH     # head dim
FF = 64          # ff_size
EPS = 1e-6
BS = B * S       # flattened query rows fed to the kernel
NHBS = NH * BS   # flattened (head, key) score columns

LANES = 128
HALF = BS // 2               # output-slab rows (8) -> one full (8,128) vreg
SCALE = 1.0 / math.sqrt(DH)
LOG2_DH = int(math.log2(DH))
LOG2_BS = int(math.log2(BS))
assert (1 << LOG2_DH) == DH and (1 << LOG2_BS) == BS
assert 4 * H == LANES and HALF * 2 == BS

W_ROWS = 2 * H + FF          # 128: [Wq|Wk|Wv|Wm] ; W1 ; W2  stacked
W_COLS = 4 * H               # 128
VEC_ROWS = 8
VEC_COLS = 3 * H             # 96

# bf16 MXU operands (v6e/v7x); all softmax/LayerNorm/residual math stays f32.
# Set to jnp.float32 to recover ~1e-4 agreement with the f32 reference.
MATMUL_DTYPE = jnp.bfloat16
APPROX_RECIP = MATMUL_DTYPE == jnp.bfloat16   # exact reciprocal on f32 path


# --------------------------- kernel ------------------------------------------
def _layernorm(x, a, b):
    # torch custom LayerNorm: a*(x-mean)/(std+eps)+b with Bessel-corrected std.
    # rsqrt (EUP) + first-order eps correction; matches 1/(sqrt(var)+eps) to
    # O(eps^2).
    mean = jnp.mean(x, axis=-1, keepdims=True)
    d = x - mean
    var = jnp.sum(d * d, axis=-1, keepdims=True) * (1.0 / (H - 1))
    r = lax.rsqrt(var)
    inv = r * (1.0 - EPS * r)
    return a * (d * inv) + b


def sa_kernel(yb_ref, w_ref, vec_ref, out_ref, act_ref):
    layer = pl.program_id(0)

    # Layer 0: pull the activation out of the input slab; afterwards it stays
    # resident in VMEM scratch across all grid steps (layers).
    @pl.when(layer == 0)
    def _():
        act_ref[...] = yb_ref[:, :H]

    y = act_ref[...]                        # (BS, H) f32
    bias = yb_ref[:, H:]                    # (BS, NH*BS) f32 additive mask

    # ---- fused QKV projection: one (BS,H)x(H,3H) MXU issue ------------------
    qkv = jnp.dot(y.astype(MATMUL_DTYPE), w_ref[:H, :3 * H],
                  preferred_element_type=jnp.float32)           # (BS, 3H)
    qkv = qkv + vec_ref[0:1, :]             # [bq|bk|bv]
    q = qkv[:, 0 * H:1 * H] * SCALE         # scale folded into q
    k = qkv[:, 1 * H:2 * H]
    v = qkv[:, 2 * H:3 * H]

    # ---- block-diagonal head layout (no per-head split/merge) ---------------
    # mask_v[h*BS+kk, c] = 1 iff column c belongs to head h (c//DH == h).
    # Built from iota + shifts: no extra DMA, cheap VPU work.
    r_i = lax.broadcasted_iota(jnp.int32, (NHBS, H), 0)
    c_i = lax.broadcasted_iota(jnp.int32, (NHBS, H), 1)
    mask_v = ((r_i >> LOG2_BS) == (c_i >> LOG2_DH)).astype(jnp.float32)

    k_rows = jnp.concatenate([k] * NH, axis=0) * mask_v          # (NH*BS, H)
    v_rows = jnp.concatenate([v] * NH, axis=0) * mask_v          # (NH*BS, H)
    # PV operand and per-head softmax denominators fused into ONE matmul:
    # output columns [0:H) -> sum_k p*v (merged-head layout),
    #                [H:2H) -> sum_k p   (per-head denominator, replicated
    #                                     across that head's DH columns).
    w_pv = jnp.concatenate([v_rows, mask_v], axis=1)             # (NH*BS, 2H)

    # ---- ONE lane-dense score matmul ----------------------------------------
    s = lax.dot_general(q.astype(MATMUL_DTYPE), k_rows.astype(MATMUL_DTYPE),
                        (((1,), (1,)), ((), ())),
                        preferred_element_type=jnp.float32)      # (BS, NH*BS)
    s = s + bias
    # Global row max instead of per-head max: any per-(row,head) constant
    # leaves softmax unchanged; head-to-head score spread is tiny so exp()
    # stays in range.  Fully-masked rows degenerate to uniform (torch-like).
    m = jnp.max(s, axis=-1, keepdims=True)
    e = jnp.exp(s - m)                                           # unnormalized

    # ---- ONE PV matmul yielding merged-head ctx + denominators --------------
    pv = jnp.dot(e.astype(MATMUL_DTYPE), w_pv.astype(MATMUL_DTYPE),
                 preferred_element_type=jnp.float32)             # (BS, 2H)
    ctx = pv[:, :H] * pl.reciprocal(pv[:, H:], approx=APPROX_RECIP)

    # ---- merge projection + residual + LayerNorm 1 ---------------------------
    atted = jnp.dot(ctx.astype(MATMUL_DTYPE), w_ref[:H, 3 * H:4 * H],
                    preferred_element_type=jnp.float32) + vec_ref[1:2, :H]
    y1 = _layernorm(y + atted, vec_ref[2:3, :H], vec_ref[3:4, :H])

    # ---- FFN: Linear -> ReLU -> Linear + residual + LayerNorm 2 --------------
    hmid = jnp.dot(y1.astype(MATMUL_DTYPE), w_ref[H:2 * H, :FF],
                   preferred_element_type=jnp.float32) + vec_ref[4:5, :FF]
    hmid = jnp.maximum(hmid, 0.0)
    ffn = jnp.dot(hmid.astype(MATMUL_DTYPE), w_ref[2 * H:, :H],
                  preferred_element_type=jnp.float32) + vec_ref[5:6, :H]
    y2 = _layernorm(y1 + ffn, vec_ref[6:7, :H], vec_ref[7:8, :H])

    # keep the activation resident for the next layer
    act_ref[...] = y2

    # Full (8,128) f32 vreg store (unmasked vst): lanes [0:H)=rows 0..7,
    # [H:2H)=rows 8..15; the remaining lanes are don't-care padding.
    top, bot = y2[:HALF, :], y2[HALF:, :]
    out_ref[...] = jnp.concatenate([top, bot, top, bot], axis=1)


# --------------------------- packing (call ONCE, hoisted) ---------------------
def pack_sa_params(layer_params):
    """Pack per-layer SA params into stacked kernel slabs (done once at build).

    Returns (w_all: (L, 128, 128) MATMUL_DTYPE, vecs: (L, 8, 96) f32).
    """
    w_slabs, v_slabs = [], []
    for p in layer_params:
        (wq, bq, wk, bk, wv, bv, wm, bm, a1, g1, w1, b1, w2, b2, a2, g2) = p
        w = jnp.zeros((W_ROWS, W_COLS), jnp.float32)
        w = w.at[:H, :].set(jnp.concatenate([wq, wk, wv, wm], axis=1))
        w = w.at[H:2 * H, :FF].set(w1)
        w = w.at[2 * H:, :H].set(w2)
        w_slabs.append(w.astype(MATMUL_DTYPE))

        vv = jnp.zeros((VEC_ROWS, VEC_COLS), jnp.float32)
        vv = vv.at[0, :].set(jnp.concatenate([bq, bk, bv]))
        vv = vv.at[1, :H].set(bm)
        vv = vv.at[2, :H].set(a1)
        vv = vv.at[3, :H].set(g1)
        vv = vv.at[4, :FF].set(b1)
        vv = vv.at[5, :H].set(b2)
        vv = vv.at[6, :H].set(a2)
        vv = vv.at[7, :H].set(g2)
        v_slabs.append(vv)
    return jnp.stack(w_slabs), jnp.stack(v_slabs)


# --------------------------- wrapper ------------------------------------------
def _attn_bias(y_mask):
    # Additive bias for the flattened (BS, NH*BS) score matrix: -1e9 where the
    # key belongs to another batch element (batch collapsed into one matmul)
    # or is a padded position, 0 elsewhere; tiled across the NH head blocks.
    key_masked = y_mask[:, 0, 0, :].reshape(-1) > 0.5            # (BS,)
    row_batch = jnp.repeat(jnp.arange(B), S)                     # (BS,)
    same_batch = row_batch[:, None] == row_batch[None, :]        # (BS, BS)
    allowed = same_batch & (~key_masked)[None, :]
    bias = jnp.where(allowed, 0.0, -1e9).astype(jnp.float32)
    return jnp.tile(bias, (1, NH))                               # (BS, NH*BS)


@jax.jit
def sa_forward(y, y_mask, w_all, vecs):
    """Apply a stack of L SA blocks (one pallas_call, grid axis = layer).

    y: (B,S,H) f32;  y_mask: (B,1,1,S) f32 (1.0 == masked/pad key);
    w_all: (L,128,128), vecs: (L,8,96) -- packed once by pack_sa_params.
    """
    num_layers = w_all.shape[0]
    y2d = y.reshape(BS, H)
    yb = jnp.concatenate([y2d, _attn_bias(y_mask)], axis=1)      # (BS, H+NH*BS)

    out = pl.pallas_call(
        sa_kernel,
        out_shape=jax.ShapeDtypeStruct((HALF, LANES), jnp.float32),
        grid_spec=pltpu.PrefetchScalarGridSpec(
            num_scalar_prefetch=0,
            grid=(num_layers,),
            in_specs=[
                # activation + mask-bias slab: same block every step -> one DMA
                pl.BlockSpec((BS, H + NHBS), lambda l: (0, 0)),
                # per-layer weight slab streamed along the layer grid axis
                pl.BlockSpec((None, W_ROWS, W_COLS), lambda l: (l, 0, 0)),
                pl.BlockSpec((None, VEC_ROWS, VEC_COLS), lambda l: (l, 0, 0)),
            ],
            out_specs=pl.BlockSpec((HALF, LANES), lambda l: (0, 0)),
            scratch_shapes=[pltpu.VMEM((BS, H), jnp.float32)],    # resident act
        ),
        compiler_params=pltpu.CompilerParams(
            dimension_semantics=("arbitrary",)),   # layers are sequential
    )(yb, w_all, vecs)

    # undo the lane-dense packing (tiny XLA reshuffle)
    y2 = jnp.concatenate([out[:, :H], out[:, H:2 * H]], axis=0)
    return y2.reshape(B, S, H)


# ----------------------- pure-JAX (PyTorch-faithful) reference ----------------
def _torch_layernorm_ref(x, a, b):
    mean = jnp.mean(x, axis=-1, keepdims=True)
    var = jnp.sum((x - mean) ** 2, axis=-1, keepdims=True) / (x.shape[-1] - 1)
    return a * (x - mean) / (jnp.sqrt(var) + EPS) + b


def sa_reference(y, y_mask, params):
    (wq, bq, wk, bk, wv, bv, wm, bm, a1, g1, w1, b1, w2, b2, a2, g2) = params
    q = y @ wq + bq
    k = y @ wk + bk
    v = y @ wv + bv

    def split(x):  # (B,S,H) -> (B,NH,S,DH)
        return x.reshape(B, S, NH, DH).transpose(0, 2, 1, 3)

    qh, kh, vh = split(q), split(k), split(v)
    scores = jnp.einsum('bhqd,bhkd->bhqk', qh, kh) / math.sqrt(DH)
    scores = jnp.where(y_mask > 0.5, jnp.float32(-1e9), scores)
    p = jax.nn.softmax(scores, axis=-1)
    att = jnp.einsum('bhqk,bhkd->bhqd', p, vh)
    att = att.transpose(0, 2, 1, 3).reshape(B, S, H)
    att = att @ wm + bm

    y1 = _torch_layernorm_ref(y + att, a1, g1)
    ffn = jnp.maximum(y1 @ w1 + b1, 0.0) @ w2 + b2
    return _torch_layernorm_ref(y1 + ffn, a2, g2)


if __name__ == "__main__":
    key = jax.random.PRNGKey(0)

    def init_linear(kw, kb, fin, fout):
        bound = 1.0 / math.sqrt(fin)
        w = jax.random.uniform(kw, (fin, fout), jnp.float32, -bound, bound)
        b = jax.random.uniform(kb, (fout,), jnp.float32, -bound, bound)
        return w, b

    def make_sa_params(k):
        ks = jax.random.split(k, 12)
        wq, bq = init_linear(ks[0], ks[1], H, H)
        wk, bk = init_linear(ks[2], ks[3], H, H)
        wv, bv = init_linear(ks[4], ks[5], H, H)
        wm, bm = init_linear(ks[6], ks[7], H, H)
        w1, b1 = init_linear(ks[8], ks[9], H, FF)
        w2, b2 = init_linear(ks[10], ks[11], FF, H)
        a1 = jnp.ones((H,), jnp.float32); g1 = jnp.zeros((H,), jnp.float32)
        a2 = jnp.ones((H,), jnp.float32); g2 = jnp.zeros((H,), jnp.float32)
        return (wq, bq, wk, bk, wv, bv, wm, bm,
                a1, g1, w1, b1, w2, b2, a2, g2)

    NUM_LAYERS = 2                       # == args.layer
    kp, kd = jax.random.split(key)
    layer_params = [make_sa_params(k) for k in jax.random.split(kp, NUM_LAYERS)]

    # Parameter packing is hoisted: done ONCE here, outside the per-call path.
    w_all, vecs = pack_sa_params(layer_params)
    w_all1, vecs1 = w_all[:1], vecs[:1]

    y = jax.random.normal(kd, (B, S, H), jnp.float32)
    # last two sequence positions are all-zero features -> make_mask marks them
    y = y.at[:, S - 2:, :].set(0.0)
    y_mask = (jnp.sum(jnp.abs(y), axis=-1) == 0)[:, None, None, :].astype(
        jnp.float32)

    tol = 5e-2 if MATMUL_DTYPE == jnp.bfloat16 else 1e-3

    # (1) single SA block -- exactly the module's SA.forward semantics.
    out1 = jax.block_until_ready(sa_forward(y, y_mask, w_all1, vecs1))
    ref1 = sa_reference(y, y_mask, layer_params[0])
    err1 = float(jnp.max(jnp.abs(out1 - ref1)))
    assert out1.shape == (B, S, H)
    assert jnp.allclose(out1, ref1, atol=tol, rtol=tol), f"single-layer err {err1}"

    # (2) layer-fused path: L SA blocks in ONE pallas_call (grid over layers,
    # activation resident in VMEM, per-layer weights streamed).  In the full
    # module, AttFlat+norm sits between Blocks (XLA-side; see TODO above), and
    # the mask is only fed to Block 0; here the same mask is used every step
    # and the reference does the same.
    outL = jax.block_until_ready(sa_forward(y, y_mask, w_all, vecs))
    refL = y
    for p in layer_params:
        refL = sa_reference(refL, y_mask, p)
    errL = float(jnp.max(jnp.abs(outL - refL)))
    assert jnp.allclose(outL, refL, atol=2 * tol, rtol=2 * tol), \
        f"stacked err {errL}"

    print("KERNEL_OK")
</pallas_src>

<mosaic_0001>
module attributes {stable_mosaic.version = 11 : i64} {
  func.func @sa_kernel(%arg0: i32, %arg1: memref<16x96xf32, #tpu.memory_space<vmem>>, %arg2: memref<1x128x128xbf16, #tpu.memory_space<vmem>>, %arg3: memref<1x8x96xf32, #tpu.memory_space<vmem>>, %arg4: memref<8x128xf32, #tpu.memory_space<vmem>>, %arg5: memref<16x32xf32, #tpu.memory_space<vmem>>) attributes {dimension_semantics = [#tpu.dimension_semantics<arbitrary>], iteration_bounds = array<i64: 1>, scalar_prefetch = 0 : i64, scratch_operands = 1 : i64, tpu.core_type = #tpu.core_type<tc>, window_params = [{pipeline_mode = #tpu.pipeline_mode<synchronous>, transform_indices = @transform_0, window_bounds = array<i64: 16, 96>}, {transform_indices = @transform_1, window_bounds = array<i64: 1, 128, 128>}, {transform_indices = @transform_2, window_bounds = array<i64: 1, 8, 96>}, {pipeline_mode = #tpu.pipeline_mode<synchronous>, transform_indices = @transform_3, window_bounds = array<i64: 8, 128>}]} {
    %c0_i32 = arith.constant 0 : i32
    %0 = arith.cmpi eq, %arg0, %c0_i32 : i32
    %1 = arith.extui %0 : i1 to i32
    %c0_i32_0 = arith.constant 0 : i32
    %2 = arith.cmpi ne, %1, %c0_i32_0 : i32
    scf.if %2 {
      %c0_54 = arith.constant 0 : index
      %c0_55 = arith.constant 0 : index
      %135 = vector.load %arg1[%c0_54, %c0_55] : memref<16x96xf32, #tpu.memory_space<vmem>>, vector<16x32xf32>
      %c0_56 = arith.constant 0 : index
      %c0_57 = arith.constant 0 : index
      %136 = vector.load %arg5[%c0_56, %c0_57] : memref<16x32xf32, #tpu.memory_space<vmem>>, vector<16x32xf32>
      tpu.vector_store %arg5[%c0_56, %c0_57], %135 {strides = array<i32>} : memref<16x32xf32, #tpu.memory_space<vmem>>, vector<16x32xf32>,
    } else {
    }
    %c0 = arith.constant 0 : index
    %c0_1 = arith.constant 0 : index
    %3 = vector.load %arg5[%c0, %c0_1] : memref<16x32xf32, #tpu.memory_space<vmem>>, vector<16x32xf32>
    %c0_2 = arith.constant 0 : index
    %c32 = arith.constant 32 : index
    %4 = vector.load %arg1[%c0_2, %c32] : memref<16x96xf32, #tpu.memory_space<vmem>>, vector<16x64xf32>
    %5 = arith.truncf %3 : vector<16x32xf32> to vector<16x32xbf16>
    %c0_3 = arith.constant 0 : index
    %c0_4 = arith.constant 0 : index
    %c0_5 = arith.constant 0 : index
    %6 = vector.load %arg2[%c0_3, %c0_4, %c0_5] : memref<1x128x128xbf16, #tpu.memory_space<vmem>>, vector<1x32x96xbf16>
    %7 = vector.shape_cast %6 : vector<1x32x96xbf16> to vector<32x96xbf16>
    %cst = arith.constant dense<0.000000e+00> : vector<16x96xf32>
    %8 = tpu.matmul %5, %7, %cst {dimension_numbers = #tpu.dot_dimension_numbers<[1], [0], [0], [1], [0, 0, 1, 1], [], []>} : vector<16x32xbf16>, vector<32x96xbf16>, vector<16x96xf32> -> vector<16x96xf32>
    %c0_6 = arith.constant 0 : index
    %c0_7 = arith.constant 0 : index
    %c0_8 = arith.constant 0 : index
    %9 = vector.load %arg3[%c0_6, %c0_7, %c0_8] : memref<1x8x96xf32, #tpu.memory_space<vmem>>, vector<1x1x96xf32>
    %10 = vector.shape_cast %9 : vector<1x1x96xf32> to vector<1x96xf32>
    %11 = vector.broadcast %10 : vector<1x96xf32> to vector<16x96xf32>
    %12 = arith.addf %8, %11 : vector<16x96xf32>
    %13 = vector.extract_strided_slice %12 {offsets = [0, 0], sizes = [16, 32], strides = [1, 1]} : vector<16x96xf32> to vector<16x32xf32>
    %cst_9 = arith.constant 0.353553385 : f32
    %14 = vector.broadcast %cst_9 : f32 to vector<16x32xf32>
    %15 = arith.mulf %13, %14 : vector<16x32xf32>
    %16 = vector.extract_strided_slice %12 {offsets = [0, 32], sizes = [16, 32], strides = [1, 1]} : vector<16x96xf32> to vector<16x32xf32>
    %17 = vector.extract_strided_slice %12 {offsets = [0, 64], sizes = [16, 32], strides = [1, 1]} : vector<16x96xf32> to vector<16x32xf32>
    %18 = tpu.iota {dimensions = array<i32: 0>} : vector<64x32xi32>
    %19 = tpu.iota {dimensions = array<i32: 1>} : vector<64x32xi32>
    %c4_i32 = arith.constant 4 : i32
    %20 = vector.broadcast %c4_i32 : i32 to vector<64x32xi32>
    %21 = arith.shrsi %18, %20 : vector<64x32xi32>
    %c3_i32 = arith.constant 3 : i32
    %22 = vector.broadcast %c3_i32 : i32 to vector<64x32xi32>
    %23 = arith.shrsi %19, %22 : vector<64x32xi32>
    %24 = arith.cmpi eq, %21, %23 : vector<64x32xi32>
    %25 = arith.extui %24 : vector<64x32xi1> to vector<64x32xi32>
    %26 = arith.sitofp %25 : vector<64x32xi32> to vector<64x32xf32>
    %27 = tpu.concatenate %16, %16, %16, %16 in 0 : vector<16x32xf32>, vector<16x32xf32>, vector<16x32xf32>, vector<16x32xf32> -> vector<64x32xf32>
    %28 = arith.mulf %27, %26 : vector<64x32xf32>
    %29 = tpu.concatenate %17, %17, %17, %17 in 0 : vector<16x32xf32>, vector<16x32xf32>, vector<16x32xf32>, vector<16x32xf32> -> vector<64x32xf32>
    %30 = arith.mulf %29, %26 : vector<64x32xf32>
    %31 = tpu.concatenate %30, %26 in 1 : vector<64x32xf32>, vector<64x32xf32> -> vector<64x64xf32>
    %32 = arith.truncf %15 : vector<16x32xf32> to vector<16x32xbf16>
    %33 = arith.truncf %28 : vector<64x32xf32> to vector<64x32xbf16>
    %cst_10 = arith.constant dense<0.000000e+00> : vector<16x64xf32>
    %34 = tpu.matmul %32, %33, %cst_10 {dimension_numbers = #tpu.dot_dimension_numbers<[1], [1], [0], [0], [0, 0, 1, 0], [], []>} : vector<16x32xbf16>, vector<64x32xbf16>, vector<16x64xf32> -> vector<16x64xf32>
    %35 = arith.addf %34, %4 : vector<16x64xf32>
    %cst_11 = arith.constant dense<0xFF800000> : vector<16xf32>
    %36 = vector.multi_reduction <maximumf>, %35, %cst_11 [1] : vector<16x64xf32> to vector<16xf32>
    %37 = vector.shape_cast %36 : vector<16xf32> to vector<16x1xf32>
    %38 = vector.broadcast %37 : vector<16x1xf32> to vector<16x64xf32>
    %39 = arith.subf %35, %38 : vector<16x64xf32>
    %40 = math.exp %39 : vector<16x64xf32>
    %41 = arith.truncf %40 : vector<16x64xf32> to vector<16x64xbf16>
    %42 = arith.truncf %31 : vector<64x64xf32> to vector<64x64xbf16>
    %cst_12 = arith.constant dense<0.000000e+00> : vector<16x64xf32>
    %43 = tpu.matmul %41, %42, %cst_12 {dimension_numbers = #tpu.dot_dimension_numbers<[1], [0], [0], [1], [0, 0, 1, 1], [], []>} : vector<16x64xbf16>, vector<64x64xbf16>, vector<16x64xf32> -> vector<16x64xf32>
    %44 = vector.extract_strided_slice %43 {offsets = [0, 0], sizes = [16, 32], strides = [1, 1]} : vector<16x64xf32> to vector<16x32xf32>
    %45 = vector.extract_strided_slice %43 {offsets = [0, 32], sizes = [16, 32], strides = [1, 1]} : vector<16x64xf32> to vector<16x32xf32>
    %46 = tpu.reciprocal %45 {approx = true} : vector<16x32xf32> -> vector<16x32xf32>
    %47 = arith.mulf %44, %46 : vector<16x32xf32>
    %48 = arith.truncf %47 : vector<16x32xf32> to vector<16x32xbf16>
    %c0_13 = arith.constant 0 : index
    %c0_14 = arith.constant 0 : index
    %c96 = arith.constant 96 : index
    %49 = vector.load %arg2[%c0_13, %c0_14, %c96] : memref<1x128x128xbf16, #tpu.memory_space<vmem>>, vector<1x32x32xbf16>
    %50 = vector.shape_cast %49 : vector<1x32x32xbf16> to vector<32x32xbf16>
    %cst_15 = arith.constant dense<0.000000e+00> : vector<16x32xf32>
    %51 = tpu.matmul %48, %50, %cst_15 {dimension_numbers = #tpu.dot_dimension_numbers<[1], [0], [0], [1], [0, 0, 1, 1], [], []>} : vector<16x32xbf16>, vector<32x32xbf16>, vector<16x32xf32> -> vector<16x32xf32>
    %c0_16 = arith.constant 0 : index
    %c1 = arith.constant 1 : index
    %c0_17 = arith.constant 0 : index
    %52 = vector.load %arg3[%c0_16, %c1, %c0_17] : memref<1x8x96xf32, #tpu.memory_space<vmem>>, vector<1x1x32xf32>
    %53 = vector.shape_cast %52 : vector<1x1x32xf32> to vector<1x32xf32>
    %54 = vector.broadcast %53 : vector<1x32xf32> to vector<16x32xf32>
    %55 = arith.addf %51, %54 : vector<16x32xf32>
    %56 = arith.addf %3, %55 : vector<16x32xf32>
    %c0_18 = arith.constant 0 : index
    %c2 = arith.constant 2 : index
    %c0_19 = arith.constant 0 : index
    %57 = vector.load %arg3[%c0_18, %c2, %c0_19] : memref<1x8x96xf32, #tpu.memory_space<vmem>>, vector<1x1x32xf32>
    %58 = vector.shape_cast %57 : vector<1x1x32xf32> to vector<1x32xf32>
    %c0_20 = arith.constant 0 : index
    %c3 = arith.constant 3 : index
    %c0_21 = arith.constant 0 : index
    %59 = vector.load %arg3[%c0_20, %c3, %c0_21] : memref<1x8x96xf32, #tpu.memory_space<vmem>>, vector<1x1x32xf32>
    %60 = vector.shape_cast %59 : vector<1x1x32xf32> to vector<1x32xf32>
    %cst_22 = arith.constant dense<0.000000e+00> : vector<16xf32>
    %61 = vector.multi_reduction <add>, %56, %cst_22 [1] : vector<16x32xf32> to vector<16xf32>
    %62 = vector.shape_cast %61 : vector<16xf32> to vector<16x1xf32>
    %cst_23 = arith.constant 3.200000e+01 : f32
    %63 = vector.broadcast %cst_23 : f32 to vector<16x1xf32>
    %64 = arith.divf %62, %63 : vector<16x1xf32>
    %65 = vector.broadcast %64 : vector<16x1xf32> to vector<16x32xf32>
    %66 = arith.subf %56, %65 : vector<16x32xf32>
    %67 = arith.mulf %66, %66 : vector<16x32xf32>
    %cst_24 = arith.constant dense<0.000000e+00> : vector<16xf32>
    %68 = vector.multi_reduction <add>, %67, %cst_24 [1] : vector<16x32xf32> to vector<16xf32>
    %69 = vector.shape_cast %68 : vector<16xf32> to vector<16x1xf32>
    %cst_25 = arith.constant 0.0322580636 : f32
    %70 = vector.broadcast %cst_25 : f32 to vector<16x1xf32>
    %71 = arith.mulf %69, %70 : vector<16x1xf32>
    %72 = math.rsqrt %71 : vector<16x1xf32>
    %cst_26 = arith.constant 9.99999997E-7 : f32
    %73 = vector.broadcast %cst_26 : f32 to vector<16x1xf32>
    %74 = arith.mulf %73, %72 : vector<16x1xf32>
    %cst_27 = arith.constant 1.000000e+00 : f32
    %75 = vector.broadcast %cst_27 : f32 to vector<16x1xf32>
    %76 = arith.subf %75, %74 : vector<16x1xf32>
    %77 = arith.mulf %72, %76 : vector<16x1xf32>
    %78 = vector.broadcast %77 : vector<16x1xf32> to vector<16x32xf32>
    %79 = arith.mulf %66, %78 : vector<16x32xf32>
    %80 = vector.broadcast %58 : vector<1x32xf32> to vector<16x32xf32>
    %81 = arith.mulf %80, %79 : vector<16x32xf32>
    %82 = vector.broadcast %60 : vector<1x32xf32> to vector<16x32xf32>
    %83 = arith.addf %81, %82 : vector<16x32xf32>
    %84 = arith.truncf %83 : vector<16x32xf32> to vector<16x32xbf16>
    %c0_28 = arith.constant 0 : index
    %c32_29 = arith.constant 32 : index
    %c0_30 = arith.constant 0 : index
    %85 = vector.load %arg2[%c0_28, %c32_29, %c0_30] : memref<1x128x128xbf16, #tpu.memory_space<vmem>>, vector<1x32x64xbf16>
    %86 = vector.shape_cast %85 : vector<1x32x64xbf16> to vector<32x64xbf16>
    %cst_31 = arith.constant dense<0.000000e+00> : vector<16x64xf32>
    %87 = tpu.matmul %84, %86, %cst_31 {dimension_numbers = #tpu.dot_dimension_numbers<[1], [0], [0], [1], [0, 0, 1, 1], [], []>} : vector<16x32xbf16>, vector<32x64xbf16>, vector<16x64xf32> -> vector<16x64xf32>
    %c0_32 = arith.constant 0 : index
    %c4 = arith.constant 4 : index
    %c0_33 = arith.constant 0 : index
    %88 = vector.load %arg3[%c0_32, %c4, %c0_33] : memref<1x8x96xf32, #tpu.memory_space<vmem>>, vector<1x1x64xf32>
    %89 = vector.shape_cast %88 : vector<1x1x64xf32> to vector<1x64xf32>
    %90 = vector.broadcast %89 : vector<1x64xf32> to vector<16x64xf32>
    %91 = arith.addf %87, %90 : vector<16x64xf32>
    %cst_34 = arith.constant 0.000000e+00 : f32
    %92 = vector.broadcast %cst_34 : f32 to vector<16x64xf32>
    %93 = arith.maximumf %91, %92 : vector<16x64xf32>
    %94 = arith.truncf %93 : vector<16x64xf32> to vector<16x64xbf16>
    %c0_35 = arith.constant 0 : index
    %c64 = arith.constant 64 : index
    %c0_36 = arith.constant 0 : index
    %95 = vector.load %arg2[%c0_35, %c64, %c0_36] : memref<1x128x128xbf16, #tpu.memory_space<vmem>>, vector<1x64x32xbf16>
    %96 = vector.shape_cast %95 : vector<1x64x32xbf16> to vector<64x32xbf16>
    %cst_37 = arith.constant dense<0.000000e+00> : vector<16x32xf32>
    %97 = tpu.matmul %94, %96, %cst_37 {dimension_numbers = #tpu.dot_dimension_numbers<[1], [0], [0], [1], [0, 0, 1, 1], [], []>} : vector<16x64xbf16>, vector<64x32xbf16>, vector<16x32xf32> -> vector<16x32xf32>
    %c0_38 = arith.constant 0 : index
    %c5 = arith.constant 5 : index
    %c0_39 = arith.constant 0 : index
    %98 = vector.load %arg3[%c0_38, %c5, %c0_39] : memref<1x8x96xf32, #tpu.memory_space<vmem>>, vector<1x1x32xf32>
    %99 = vector.shape_cast %98 : vector<1x1x32xf32> to vector<1x32xf32>
    %100 = vector.broadcast %99 : vector<1x32xf32> to vector<16x32xf32>
    %101 = arith.addf %97, %100 : vector<16x32xf32>
    %102 = arith.addf %83, %101 : vector<16x32xf32>
    %c0_40 = arith.constant 0 : index
    %c6 = arith.constant 6 : index
    %c0_41 = arith.constant 0 : index
    %103 = vector.load %arg3[%c0_40, %c6, %c0_41] : memref<1x8x96xf32, #tpu.memory_space<vmem>>, vector<1x1x32xf32>
    %104 = vector.shape_cast %103 : vector<1x1x32xf32> to vector<1x32xf32>
    %c0_42 = arith.constant 0 : index
    %c7 = arith.constant 7 : index
    %c0_43 = arith.constant 0 : index
    %105 = vector.load %arg3[%c0_42, %c7, %c0_43] : memref<1x8x96xf32, #tpu.memory_space<vmem>>, vector<1x1x32xf32>
    %106 = vector.shape_cast %105 : vector<1x1x32xf32> to vector<1x32xf32>
    %cst_44 = arith.constant dense<0.000000e+00> : vector<16xf32>
    %107 = vector.multi_reduction <add>, %102, %cst_44 [1] : vector<16x32xf32> to vector<16xf32>
    %108 = vector.shape_cast %107 : vector<16xf32> to vector<16x1xf32>
    %cst_45 = arith.constant 3.200000e+01 : f32
    %109 = vector.broadcast %cst_45 : f32 to vector<16x1xf32>
    %110 = arith.divf %108, %109 : vector<16x1xf32>
    %111 = vector.broadcast %110 : vector<16x1xf32> to vector<16x32xf32>
    %112 = arith.subf %102, %111 : vector<16x32xf32>
    %113 = arith.mulf %112, %112 : vector<16x32xf32>
    %cst_46 = arith.constant dense<0.000000e+00> : vector<16xf32>
    %114 = vector.multi_reduction <add>, %113, %cst_46 [1] : vector<16x32xf32> to vector<16xf32>
    %115 = vector.shape_cast %114 : vector<16xf32> to vector<16x1xf32>
    %cst_47 = arith.constant 0.0322580636 : f32
    %116 = vector.broadcast %cst_47 : f32 to vector<16x1xf32>
    %117 = arith.mulf %115, %116 : vector<16x1xf32>
    %118 = math.rsqrt %117 : vector<16x1xf32>
    %cst_48 = arith.constant 9.99999997E-7 : f32
    %119 = vector.broadcast %cst_48 : f32 to vector<16x1xf32>
    %120 = arith.mulf %119, %118 : vector<16x1xf32>
    %cst_49 = arith.constant 1.000000e+00 : f32
    %121 = vector.broadcast %cst_49 : f32 to vector<16x1xf32>
    %122 = arith.subf %121, %120 : vector<16x1xf32>
    %123 = arith.mulf %118, %122 : vector<16x1xf32>
    %124 = vector.broadcast %123 : vector<16x1xf32> to vector<16x32xf32>
    %125 = arith.mulf %112, %124 : vector<16x32xf32>
    %126 = vector.broadcast %104 : vector<1x32xf32> to vector<16x32xf32>
    %127 = arith.mulf %126, %125 : vector<16x32xf32>
    %128 = vector.broadcast %106 : vector<1x32xf32> to vector<16x32xf32>
    %129 = arith.addf %127, %128 : vector<16x32xf32>
    %c0_50 = arith.constant 0 : index
    %c0_51 = arith.constant 0 : index
    %130 = vector.load %arg5[%c0_50, %c0_51] : memref<16x32xf32, #tpu.memory_space<vmem>>, vector<16x32xf32>
    tpu.vector_store %arg5[%c0_50, %c0_51], %129 {strides = array<i32>} : memref<16x32xf32, #tpu.memory_space<vmem>>, vector<16x32xf32>,
    %131 = vector.extract_strided_slice %129 {offsets = [0, 0], sizes = [8, 32], strides = [1, 1]} : vector<16x32xf32> to vector<8x32xf32>
    %132 = vector.extract_strided_slice %129 {offsets = [8, 0], sizes = [8, 32], strides = [1, 1]} : vector<16x32xf32> to vector<8x32xf32>
    %133 = tpu.concatenate %131, %132, %131, %132 in 1 : vector<8x32xf32>, vector<8x32xf32>, vector<8x32xf32>, vector<8x32xf32> -> vector<8x128xf32>
    %c0_52 = arith.constant 0 : index
    %c0_53 = arith.constant 0 : index
    %134 = vector.load %arg4[%c0_52, %c0_53] : memref<8x128xf32, #tpu.memory_space<vmem>>, vector<8x128xf32>
    tpu.vector_store %arg4[%c0_52, %c0_53], %133 {strides = array<i32>} : memref<8x128xf32, #tpu.memory_space<vmem>>, vector<8x128xf32>,
    return
  }
  func.func @transform_0(%arg0: i32) -> (i32, i32) {
    %c0_i32 = arith.constant 0 : i32
    %c0_i32_0 = arith.constant 0 : i32
    %c0_i32_1 = arith.constant 0 : i32
    return %c0_i32, %c0_i32_0 : i32, i32
  }
  func.func @transform_1(%arg0: i32) -> (i32, i32, i32) {
    %c0_i32 = arith.constant 0 : i32
    %c0_i32_0 = arith.constant 0 : i32
    %c0_i32_1 = arith.constant 0 : i32
    return %arg0, %c0_i32, %c0_i32_0 : i32, i32, i32
  }
  func.func @transform_2(%arg0: i32) -> (i32, i32, i32) {
    %c0_i32 = arith.constant 0 : i32
    %c0_i32_0 = arith.constant 0 : i32
    %c0_i32_1 = arith.constant 0 : i32
    return %arg0, %c0_i32, %c0_i32_0 : i32, i32, i32
  }
  func.func @transform_3(%arg0: i32) -> (i32, i32) {
    %c0_i32 = arith.constant 0 : i32
    %c0_i32_0 = arith.constant 0 : i32
    %c0_i32_1 = arith.constant 0 : i32
    return %c0_i32, %c0_i32_0 : i32, i32
  }
}

</mosaic_0001>

<llo_original>
// kernel: tile.9
$region0: #{tile.9}
  %s0 = inlined_call_operand.vmem [shape: f32[16,4,16], index: 0, kind: input, shape index: {}]
  %s1 = inlined_call_operand.vmem [shape: f32[16,64], index: 1, kind: output, shape index: {}]
  $region1: #{tile.9} parent=0
    #allocation0 [shape = 'u8[65536]{0}', space=vmem, size = 0x10000, scoped, tag = 'scoped mem for input reshape']
    %s3 = sshll.u32 1, 4
    %s4 = ssub.s32 %s3, 1
    %s5 = smul.addr 4, 15
    %s6 = scalar_lea.vmem %s0, %s5
    %v7 = vld [vmem:[%s6] sm:%s4]
    %s8 = scalar_lea.vmem [#allocation0], 120
    %9 = vst [vmem:[%s8] sm:%s4] %v7
    %s10 = smul.addr 4, 14
    %s11 = scalar_lea.vmem %s0, %s10
    %v12 = vld [vmem:[%s11] sm:%s4]
    %s13 = scalar_lea.vmem [#allocation0], 112
    %14 = vst [vmem:[%s13] sm:%s4] %v12
    %s15 = smul.addr 4, 13
    %s16 = scalar_lea.vmem %s0, %s15
    %v17 = vld [vmem:[%s16] sm:%s4]
    %s18 = scalar_lea.vmem [#allocation0], 104
    %19 = vst [vmem:[%s18] sm:%s4] %v17
    %s20 = smul.addr 4, 12
    %s21 = scalar_lea.vmem %s0, %s20
    %v22 = vld [vmem:[%s21] sm:%s4]
    %s23 = scalar_lea.vmem [#allocation0], 96
    %24 = vst [vmem:[%s23] sm:%s4] %v22
    %s25 = smul.addr 4, 11
    %s26 = scalar_lea.vmem %s0, %s25
    %v27 = vld [vmem:[%s26] sm:%s4]
    %s28 = scalar_lea.vmem [#allocation0], 88
    %29 = vst [vmem:[%s28] sm:%s4] %v27
    %s30 = smul.addr 4, 10
    %s31 = scalar_lea.vmem %s0, %s30
    %v32 = vld [vmem:[%s31] sm:%s4]
    %s33 = scalar_lea.vmem [#allocation0], 80
    %34 = vst [vmem:[%s33] sm:%s4] %v32
    %s35 = smul.addr 4, 9
    %s36 = scalar_lea.vmem %s0, %s35
    %v37 = vld [vmem:[%s36] sm:%s4]
    %s38 = scalar_lea.vmem [#allocation0], 72
    %39 = vst [vmem:[%s38] sm:%s4] %v37
    %s40 = smul.addr 4, 8
    %s41 = scalar_lea.vmem %s0, %s40
    %v42 = vld [vmem:[%s41] sm:%s4]
    %s43 = scalar_lea.vmem [#allocation0], 64
    %44 = vst [vmem:[%s43] sm:%s4] %v42
    %s45 = smul.addr 4, 7
    %s46 = scalar_lea.vmem %s0, %s45
    %v47 = vld [vmem:[%s46] sm:%s4]
    %s48 = scalar_lea.vmem [#allocation0], 56
    %49 = vst [vmem:[%s48] sm:%s4] %v47
    %s50 = smul.addr 4, 6
    %s51 = scalar_lea.vmem %s0, %s50
    %v52 = vld [vmem:[%s51] sm:%s4]
    %s53 = scalar_lea.vmem [#allocation0], 48
    %54 = vst [vmem:[%s53] sm:%s4] %v52
    %s55 = smul.addr 4, 5
    %s56 = scalar_lea.vmem %s0, %s55
    %v57 = vld [vmem:[%s56] sm:%s4]
    %s58 = scalar_lea.vmem [#allocation0], 40
    %59 = vst [vmem:[%s58] sm:%s4] %v57
    %s60 = smul.addr 4, 4
    %s61 = scalar_lea.vmem %s0, %s60
    %v62 = vld [vmem:[%s61] sm:%s4]
    %s63 = scalar_lea.vmem [#allocation0], 32
    %64 = vst [vmem:[%s63] sm:%s4] %v62
    %s65 = smul.addr 4, 3
    %s66 = scalar_lea.vmem %s0, %s65
    %v67 = vld [vmem:[%s66] sm:%s4]
    %s68 = scalar_lea.vmem [#allocation0], 24
    %69 = vst [vmem:[%s68] sm:%s4] %v67
    %s70 = smul.addr 4, 2
    %s71 = scalar_lea.vmem %s0, %s70
    %v72 = vld [vmem:[%s71] sm:%s4]
    %s73 = scalar_lea.vmem [#allocation0], 16
    %74 = vst [vmem:[%s73] sm:%s4] %v72
    %s75 = scalar_lea.vmem %s0, 4
    %v76 = vld [vmem:[%s75] sm:%s4]
    %s77 = scalar_lea.vmem [#allocation0], 8
    %78 = vst [vmem:[%s77] sm:%s4] %v76
    %v79 = vld [vmem:[%s0] sm:%s4]
    %80 = vst [vmem:[#allocation0] sm:%s4] %v79
    %v81 = vld [vmem:[#allocation0] ss:$8 sm:$0xf]
    %v82 = vld [vmem:[#allocation0] ss:$8 sm:$0xf0]
    %vm83 = vcmask 1047556
    %v84 = vsel %vm83, %v82, %v81
    %vm85 = vcmask 130048
    %86 = vst.msk [vmem:[%s1] sm:$0xff] %vm85, %v84
    %s87 = scalar_lea.vmem [#allocation0], 64
    %v88 = vld [vmem:[%s87] ss:$8 sm:$0xf]
    %s89 = scalar_lea.vmem [#allocation0], 64
    %v90 = vld [vmem:[%s89] ss:$8 sm:$0xf0]
    %vm91 = vcmask 1047556
    %v92 = vsel %vm91, %v90, %v88
    %vm93 = vcmask 130048
    %s94 = scalar_lea.vmem %s1, 8
    %95 = vst.msk [vmem:[%s94] sm:$0xff] %vm93, %v92
    %s96 = scalar_lea.vmem [#allocation0], 3
    %v97 = vld [vmem:[%s96] ss:$8 sm:$0xf]
    %s98 = scalar_lea.vmem [#allocation0], 3
    %v99 = vld [vmem:[%s98] ss:$8 sm:$0xf0]
    %vm100 = vcmask 1047556
    %v101 = vsel %vm100, %v99, %v97
    %102 = vrot.lane.b32.xlu0 %v101, 48
    %v103 = vpop.permute.xlu0 %102
    %vm104 = vcmask 523648
    %105 = vst.msk [vmem:[%s1] sm:$0xff] %vm104, %v103
    %s106 = scalar_lea.vmem [#allocation0], 67
    %v107 = vld [vmem:[%s106] ss:$8 sm:$0xf]
    %s108 = scalar_lea.vmem [#allocation0], 67
    %v109 = vld [vmem:[%s108] ss:$8 sm:$0xf0]
    %vm110 = vcmask 1047556
    %v111 = vsel %vm110, %v109, %v107
    %112 = vrot.lane.b32.xlu0 %v111, 48
    %v113 = vpop.permute.xlu0 %112
    %vm114 = vcmask 523648
    %s115 = scalar_lea.vmem %s1, 8
    %116 = vst.msk [vmem:[%s115] sm:$0xff] %vm114, %v113
    %s117 = scalar_lea.vmem [#allocation0], 2
    %v118 = vld [vmem:[%s117] ss:$8 sm:$0xf]
    %s119 = scalar_lea.vmem [#allocation0], 2
    %v120 = vld [vmem:[%s119] ss:$8 sm:$0xf0]
    %vm121 = vcmask 1047556
    %v122 = vsel %vm121, %v120, %v118
    %123 = vrot.lane.b32.xlu0 %v122, 32
    %v124 = vpop.permute.xlu0 %123
    %vm125 = vcmask 392448
    %126 = vst.msk [vmem:[%s1] sm:$0xff] %vm125, %v124
    %s127 = scalar_lea.vmem [#allocation0], 66
    %v128 = vld [vmem:[%s127] ss:$8 sm:$0xf]
    %s129 = scalar_lea.vmem [#allocation0], 66
    %v130 = vld [vmem:[%s129] ss:$8 sm:$0xf0]
    %vm131 = vcmask 1047556
    %v132 = vsel %vm131, %v130, %v128
    %133 = vrot.lane.b32.xlu0 %v132, 32
    %v134 = vpop.permute.xlu0 %133
    %vm135 = vcmask 392448
    %s136 = scalar_lea.vmem %s1, 8
    %137 = vst.msk [vmem:[%s136] sm:$0xff] %vm135, %v134
    %s138 = scalar_lea.vmem [#allocation0], 1
    %v139 = vld [vmem:[%s138] ss:$8 sm:$0xf]
    %s140 = scalar_lea.vmem [#allocation0], 1
    %v141 = vld [vmem:[%s140] ss:$8 sm:$0xf0]
    %vm142 = vcmask 1047556
    %v143 = vsel %vm142, %v141, %v139
    %144 = vrot.lane.b32.xlu0 %v143, 16
    %v145 = vpop.permute.xlu0 %144
    %vm146 = vcmask 261248
    %147 = vst.msk [vmem:[%s1] sm:$0xff] %vm146, %v145
    %s148 = scalar_lea.vmem [#allocation0], 65
    %v149 = vld [vmem:[%s148] ss:$8 sm:$0xf]
    %s150 = scalar_lea.vmem [#allocation0], 65
    %v151 = vld [vmem:[%s150] ss:$8 sm:$0xf0]
    %vm152 = vcmask 1047556
    %v153 = vsel %vm152, %v151, %v149
    %154 = vrot.lane.b32.xlu0 %v153, 16
    %v155 = vpop.permute.xlu0 %154
    %vm156 = vcmask 261248
    %s157 = scalar_lea.vmem %s1, 8
    %158 = vst.msk [vmem:[%s157] sm:$0xff] %vm156, %v155

// kernel: sa_forward.1
$region0: #{sa_forward.1}
  #allocation0 [shape = 'u32[]', space=smem, size = 0x4, offset = 0x4, fixed_abs, tag = 'smem constant byte address 0x4 - core index']
  #allocation1 [shape = 'u32[144,128]{1,0:T(1,128)}', space=vmem, size = 0x12000, scoped, tag = 'internal scratch']
  #allocation2 [shape = 'f32[16,32]{1,0:T(8,128)}', space=vmem, size = 0x2000, scoped, tag = 'scratch operand']
  %s0 = inlined_call_operand.vmem [shape: f32[16,96], index: 0, kind: input, shape index: {}]
  %s1 = inlined_call_operand.vmem [shape: bf16[1,128,128], index: 1, kind: input, shape index: {}]
  %s2 = inlined_call_operand.vmem [shape: f32[1,8,96], index: 2, kind: input, shape index: {}]
  %s3 = inlined_call_operand.vmem [shape: f32[8,128], index: 3, kind: output, shape index: {}]
  %s4 = sld [smem:[#allocation0]]
  $region26: #{sa_forward.1} parent=0
    _
  %s6 = ssub.s32 1, %s4
  %s7 = scalar_select 0, %s6, %s4
  // Predicated region
  $region2: #{sa_forward.1} parent=0 // pred_check
    _
  $region3: #{sa_forward.1} parent=0 // pred_check_branch
    %9 = sbr.rel (0) target = $region5
  $region4: #{sa_forward.1} parent=0 // pred_region
    _
  $region5: #{sa_forward.1} parent=0 // pred_fallthru
    _
  // Predicated region
  $region6: #{sa_forward.1} parent=0 // pred_check
    _
  $region7: #{sa_forward.1} parent=0 // pred_check_branch
    %11 = sbr.rel (0) target = $region9
  $region8: #{sa_forward.1} parent=0 // pred_region
    _
  $region9: #{sa_forward.1} parent=0 // pred_fallthru
    _
  // Predicated region
  $region10: #{sa_forward.1} parent=0 // pred_check
    _
  $region11: #{sa_forward.1} parent=0 // pred_check_branch
    %13 = sbr.rel (0) target = $region13
  $region12: #{sa_forward.1} parent=0 // pred_region
    _
  $region13: #{sa_forward.1} parent=0 // pred_fallthru
    _
  %p15 = scmp.eq.s32.totalorder 0, 0
  // Predicated region
  $region14: #{sa_forward.1} parent=0 // pred_check
    %p16 = pneg %p15
  $region15: #{sa_forward.1} parent=0 // pred_check_branch
    %18 = sbr.rel (%p16) target = $region17
  $region16: #{sa_forward.1} parent=0 // pred_region
    %v19 = vld [vmem:[%s0] sm:$0xff]
    %v20 = vld [vmem:[%s0 + $0x8] sm:$0xff]
    %vm21 = vcmask 261120
    %22 = vst.msk [vmem:[#allocation2] sm:$0xff] %vm21, %v19
    %23 = vst.msk [vmem:[#allocation2 + $0x8] sm:$0xff] %vm21, %v20
  $region17: #{sa_forward.1} parent=0 // pred_fallthru
    _
  %v24 = vld [vmem:[#allocation2] sm:$0xff]
  %v25 = vld [vmem:[#allocation2 + $0x8] sm:$0xff]
  %v26 = vld [vmem:[%s0] sm:$0xff]
  %v27 = vld [vmem:[%s0 + $0x8] sm:$0xff]
  %v28 = vpack.c.bf16 %v25, %v24
  %v29 = vld [vmem:[%s1] sm:$0xf]
  %v30 = vld [vmem:[%s1 + $0x4] sm:$0xf]
  %v31 = vld [vmem:[%s1 + $0x8] sm:$0xf]
  %v32 = vld [vmem:[%s1 + $0xc] sm:$0xf]
  %v33 = vld [vmem:[%s2] sm:$0x1]
  %v34 = vlaneseq
  %v35 = vshrl.u32 %v34, 7
  %v36 = vsub.s32 0, %v35
  %v37 = vrot.slane %v33, %v36
  %v42 = vunpack.c.l.b16 %v29
  %v43 = vunpack.c.l.b16 %v30
  %v44 = vunpack.c.l.b16 %v31
  %v45 = vunpack.c.l.b16 %v32
  %v46 = vpack.c.b16 %v43, %v42
  %v47 = vpack.c.b16 %v45, %v44
  %vm50 = vcmask 261120
  %v52 = vsel %vm50, %v28, 0
  %54 = vmatprep.subr.bf16.mxu0 0
  %55 = vmatpush1.bf16.msra.mxu0 0
  %56 = vmatprep.subr.bf16.mxu0 0
  %57 = vmatpush1.bf16.msra.mxu0 0
  %58 = vmatprep.subr.bf16.mxu0 0
  %59 = vmatpush1.bf16.msra.mxu0 0
  %60 = vmatprep.subr.bf16.mxu0 0
  %61 = vmatpush1.bf16.msra.mxu0 0
  %62 = vmatprep.subr.bf16.mxu0 0
  %63 = vmatpush1.bf16.msra.mxu0 0
  %64 = vmatprep.subr.bf16.mxu0 0
  %65 = vmatpush1.bf16.msra.mxu0 0
  %66 = vmatprep.subr.bf16.mxu0 0
  %67 = vmatpush1.bf16.msra.mxu0 %v47
  %68 = vmatprep.subr.bf16.mxu0 0
  %69 = vmatpush1.bf16.msra.mxu0 %v46
  %70 = vmatprep.subr.bf16.mxu0 0
  %71 = vmatpush2.bf16.msra.mxu0 0
  %72 = vmatprep.subr.bf16.mxu0 0
  %73 = vmatpush2.bf16.msra.mxu0 0
  %74 = vmatprep.subr.bf16.mxu0 0
  %75 = vmatpush2.bf16.msra.mxu0 0
  %76 = vmatprep.subr.bf16.mxu0 0
  %77 = vmatpush2.bf16.msra.mxu0 0
  %78 = vmatprep.subr.bf16.mxu0 0
  %79 = vmatpush2.bf16.msra.mxu0 0
  %80 = vmatprep.subr.bf16.mxu0 0
  %81 = vmatpush2.bf16.msra.mxu0 0
  %82 = vmatprep.subr.bf16.mxu0 0
  %83 = vmatpush2.bf16.msra.mxu0 0
  %84 = vmatprep.subr.bf16.mxu0 0
  %85 = vmatpush2.bf16.msra.mxu0 0
  %86 = vmatprep.mubr.bf16.mxu0 0
  %87 = vmatmul.mubr.bf16.gmra.mxu0 %v52
  %v88 = vpop.f32.mrf.mxu0
  %v89 = vadd.f32 %v37, %v88
  %v90 = vpop.f32.mrf.mxu0
  %v91 = vpop.f32.mrf.mxu0
  %v92 = vadd.f32 %v37, %v91
  %v93 = vpop.f32.mrf.mxu0
  %94 = vdwg.mxu0
  %v95 = vmul.f32 %v89, 0.35355338
  %v96 = vmul.f32 %v92, 0.35355338
  %v97 = vlaneseq
  %v98 = vshrl.u32 %v97, 7
  %v99 = vadd.s32 %v98, 8
  %v100 = vadd.s32 %v98, 16
  %v101 = vadd.s32 %v98, 24
  %v102 = vadd.s32 %v98, 32
  %v103 = vadd.s32 %v98, 40
  %v104 = vadd.s32 %v98, 48
  %v105 = vadd.s32 %v98, 56
  %v106 = vlaneseq
  %v107 = vand.u32 %v106, 127
  %v108 = vshra.s32 %v98, 4
  %v109 = vshra.s32 %v99, 4
  %v110 = vshra.s32 %v100, 4
  %v111 = vshra.s32 %v101, 4
  %v112 = vshra.s32 %v102, 4
  %v113 = vshra.s32 %v103, 4
  %v114 = vshra.s32 %v104, 4
  %v115 = vshra.s32 %v105, 4
  %v116 = vshra.s32 %v107, 3
  %vm117 = vcmp.eq.s32.totalorder %v108, %v116
  %vm118 = vcmp.eq.s32.totalorder %v109, %v116
  %vm119 = vcmp.eq.s32.totalorder %v110, %v116
  %vm120 = vcmp.eq.s32.totalorder %v111, %v116
  %vm121 = vcmp.eq.s32.totalorder %v112, %v116
  %vm122 = vcmp.eq.s32.totalorder %v113, %v116
  %vm123 = vcmp.eq.s32.totalorder %v114, %v116
  %vm124 = vcmp.eq.s32.totalorder %v115, %v116
  %v125 = vsel %vm117, 1, 0
  %v126 = vsel %vm118, 1, 0
  %v127 = vsel %vm119, 1, 0
  %v128 = vsel %vm120, 1, 0
  %v129 = vsel %vm121, 1, 0
  %v130 = vsel %vm122, 1, 0
  %v131 = vsel %vm123, 1, 0
  %v132 = vsel %vm124, 1, 0
  %v133 = vcvt.s32.f32 %v125
  %v134 = vcvt.s32.f32 %v126
  %v135 = vcvt.s32.f32 %v127
  %v136 = vcvt.s32.f32 %v128
  %v137 = vcvt.s32.f32 %v129
  %v138 = vcvt.s32.f32 %v130
  %v139 = vcvt.s32.f32 %v131
  %v140 = vcvt.s32.f32 %v132
  %149 = vrot.lane.b32.xlu0 %v133, 32
  %v150 = vpop.permute.xlu0 %149
  %151 = vrot.lane.b32.xlu0 %v134, 32
  %v152 = vpop.permute.xlu0 %151
  %153 = vrot.lane.b32.xlu0 %v135, 32
  %v154 = vpop.permute.xlu0 %153
  %155 = vrot.lane.b32.xlu0 %v136, 32
  %v156 = vpop.permute.xlu0 %155
  %157 = vrot.lane.b32.xlu0 %v137, 32
  %v158 = vpop.permute.xlu0 %157
  %159 = vrot.lane.b32.xlu0 %v138, 32
  %v160 = vpop.permute.xlu0 %159
  %161 = vrot.lane.b32.xlu0 %v139, 32
  %v162 = vpop.permute.xlu0 %161
  %163 = vrot.lane.b32.xlu0 %v140, 32
  %v164 = vpop.permute.xlu0 %163
  %v173 = vmul.f32 %v89, %v150
  %v174 = vmul.f32 %v92, %v152
  %v175 = vmul.f32 %v89, %v154
  %v176 = vmul.f32 %v92, %v156
  %v177 = vmul.f32 %v89, %v158
  %v178 = vmul.f32 %v92, %v160
  %v179 = vmul.f32 %v89, %v162
  %v180 = vmul.f32 %v92, %v164
  %181 = vrot.lane.b32.xlu0 %v133, 64
  %v182 = vpop.permute.xlu0 %181
  %183 = vrot.lane.b32.xlu0 %v134, 64
  %v184 = vpop.permute.xlu0 %183
  %185 = vrot.lane.b32.xlu0 %v135, 64
  %v186 = vpop.permute.xlu0 %185
  %187 = vrot.lane.b32.xlu0 %v136, 64
  %v188 = vpop.permute.xlu0 %187
  %189 = vrot.lane.b32.xlu0 %v137, 64
  %v190 = vpop.permute.xlu0 %189
  %191 = vrot.lane.b32.xlu0 %v138, 64
  %v192 = vpop.permute.xlu0 %191
  %193 = vrot.lane.b32.xlu0 %v139, 64
  %v194 = vpop.permute.xlu0 %193
  %195 = vrot.lane.b32.xlu0 %v140, 64
  %v196 = vpop.permute.xlu0 %195
  %v205 = vmul.f32 %v89, %v182
  %v206 = vmul.f32 %v92, %v184
  %v207 = vmul.f32 %v89, %v186
  %v208 = vmul.f32 %v92, %v188
  %v209 = vmul.f32 %v89, %v190
  %v210 = vmul.f32 %v92, %v192
  %v211 = vmul.f32 %v89, %v194
  %v212 = vmul.f32 %v92, %v196
  %221 = vrot.lane.b32.xlu0 %v205, 64
  %v222 = vpop.permute.xlu0 %221
  %223 = vrot.lane.b32.xlu0 %v206, 64
  %v224 = vpop.permute.xlu0 %223
  %225 = vrot.lane.b32.xlu0 %v207, 64
  %v226 = vpop.permute.xlu0 %225
  %227 = vrot.lane.b32.xlu0 %v208, 64
  %v228 = vpop.permute.xlu0 %227
  %229 = vrot.lane.b32.xlu0 %v209, 64
  %v230 = vpop.permute.xlu0 %229
  %231 = vrot.lane.b32.xlu0 %v210, 64
  %v232 = vpop.permute.xlu0 %231
  %233 = vrot.lane.b32.xlu0 %v211, 64
  %v234 = vpop.permute.xlu0 %233
  %235 = vrot.lane.b32.xlu0 %v212, 64
  %v236 = vpop.permute.xlu0 %235
  %v245 = vsel %vm50, %v222, %v150
  %v246 = vsel %vm50, %v224, %v152
  %v247 = vsel %vm50, %v226, %v154
  %v248 = vsel %vm50, %v228, %v156
  %v249 = vsel %vm50, %v230, %v158
  %v250 = vsel %vm50, %v232, %v160
  %v251 = vsel %vm50, %v234, %v162
  %v252 = vsel %vm50, %v236, %v164
  %v253 = vpack.c.bf16 %v96, %v95
  %v254 = vpack.c.bf16 %v174, %v173
  %v255 = vpack.c.bf16 %v176, %v175
  %v256 = vpack.c.bf16 %v178, %v177
  %v257 = vpack.c.bf16 %v180, %v179
  %262 = vrot.lane.b32.xlu0 %v254, 96
  %v263 = vpop.permute.xlu0 %262
  %264 = vrot.lane.b32.xlu0 %v255, 96
  %v265 = vpop.permute.xlu0 %264
  %266 = vrot.lane.b32.xlu0 %v256, 96
  %v267 = vpop.permute.xlu0 %266
  %268 = vrot.lane.b32.xlu0 %v257, 96
  %v269 = vpop.permute.xlu0 %268
  %272 = vrot.lane.b32.xlu0 %v26, 96
  %v273 = vpop.permute.xlu0 %272
  %274 = vrot.lane.b32.xlu0 %v27, 96
  %v275 = vpop.permute.xlu0 %274
  %v279 = vsel %vm50, %v253, 0
  %v282 = vsel %vm50, %v263, 0
  %v285 = vsel %vm50, %v265, 0
  %v288 = vsel %vm50, %v267, 0
  %v291 = vsel %vm50, %v269, 0
  %293 = vmatprep.subr.bf16.mxu0 0
  %294 = vmatpush1.bf16.xpose.msra.mxu0 0
  %295 = vmatprep.subr.bf16.mxu0 0
  %296 = vmatpush1.bf16.xpose.msra.mxu0 0
  %297 = vmatprep.subr.bf16.mxu0 0
  %298 = vmatpush1.bf16.xpose.msra.mxu0 0
  %299 = vmatprep.subr.bf16.mxu0 0
  %300 = vmatpush1.bf16.xpose.msra.mxu0 0
  %301 = vmatprep.subr.bf16.mxu0 0
  %302 = vmatpush1.bf16.xpose.msra.mxu0 %v291
  %303 = vmatprep.subr.bf16.mxu0 0
  %304 = vmatpush1.bf16.xpose.msra.mxu0 %v288
  %305 = vmatprep.subr.bf16.mxu0 0
  %306 = vmatpush1.bf16.xpose.msra.mxu0 %v285
  %307 = vmatprep.subr.bf16.mxu0 0
  %308 = vmatpush1.bf16.xpose.msra.mxu0 %v282
  %309 = vmatprep.subr.bf16.mxu0 0
  %310 = vmatpush2.bf16.xpose.msra.mxu0 0
  %311 = vmatprep.subr.bf16.mxu0 0
  %312 = vmatpush2.bf16.xpose.msra.mxu0 0
  %313 = vmatprep.subr.bf16.mxu0 0
  %314 = vmatpush2.bf16.xpose.msra.mxu0 0
  %315 = vmatprep.subr.bf16.mxu0 0
  %316 = vmatpush2.bf16.xpose.msra.mxu0 0
  %317 = vmatprep.subr.bf16.mxu0 0
  %318 = vmatpush2.bf16.xpose.msra.mxu0 0
  %319 = vmatprep.subr.bf16.mxu0 0
  %320 = vmatpush2.bf16.xpose.msra.mxu0 0
  %321 = vmatprep.subr.bf16.mxu0 0
  %322 = vmatpush2.bf16.xpose.msra.mxu0 0
  %323 = vmatprep.subr.bf16.mxu0 0
  %324 = vmatpush2.bf16.xpose.msra.mxu0 0
  %325 = vmatprep.mubr.bf16.mxu0 0
  %326 = vmatmul.mubr.bf16.gmra.mxu0 %v279
  %v327 = vpop.f32.mrf.mxu0
  %v328 = vadd.f32 %v273, %v327
  %v329 = vpop.f32.mrf.mxu0
  %v330 = vpop.f32.mrf.mxu0
  %v331 = vadd.f32 %v275, %v330
  %v332 = vpop.f32.mrf.mxu0
  %333 = vdwg.mxu0
  %vm334 = vcmask 523264
  %v335 = vsel %vm334, %v328, -inf
  %336 = vmax.xlane.f32.xlu0 %v335
  %v337 = vpop.xlane.xlu0 %336
  %v338 = vsel %vm334, %v331, -inf
  %339 = vmax.xlane.f32.xlu0 %v338
  %v340 = vpop.xlane.xlu0 %339
  %v341 = vsub.f32 %v328, %v337
  %v342 = vsub.f32 %v331, %v340
  %v343 = vmul.f32 %v341, 1.442695
  %v344 = vpow.pop %v343
  %v345 = vmul.f32 %v342, 1.442695
  %v346 = vpow.pop %v345
  %v347 = vpack.c.bf16 %v346, %v344
  %v348 = vpack.c.bf16 %v246, %v245
  %v349 = vpack.c.bf16 %v248, %v247
  %v350 = vpack.c.bf16 %v250, %v249
  %v351 = vpack.c.bf16 %v252, %v251
  %v353 = vsel %vm334, %v347, 0
  %355 = vmatprep.subr.bf16.mxu0 0
  %356 = vmatpush1.bf16.msra.mxu0 0
  %357 = vmatprep.subr.bf16.mxu0 0
  %358 = vmatpush1.bf16.msra.mxu0 0
  %359 = vmatprep.subr.bf16.mxu0 0
  %360 = vmatpush1.bf16.msra.mxu0 0
  %361 = vmatprep.subr.bf16.mxu0 0
  %362 = vmatpush1.bf16.msra.mxu0 0
  %363 = vmatprep.subr.bf16.mxu0 0
  %364 = vmatpush1.bf16.msra.mxu0 %v351
  %365 = vmatprep.subr.bf16.mxu0 0
  %366 = vmatpush1.bf16.msra.mxu0 %v350
  %367 = vmatprep.subr.bf16.mxu0 0
  %368 = vmatpush1.bf16.msra.mxu0 %v349
  %369 = vmatprep.subr.bf16.mxu0 0
  %370 = vmatpush1.bf16.msra.mxu0 %v348
  %371 = vmatprep.subr.bf16.mxu0 0
  %372 = vmatpush2.bf16.msra.mxu0 0
  %373 = vmatprep.subr.bf16.mxu0 0
  %374 = vmatpush2.bf16.msra.mxu0 0
  %375 = vmatprep.subr.bf16.mxu0 0
  %376 = vmatpush2.bf16.msra.mxu0 0
  %377 = vmatprep.subr.bf16.mxu0 0
  %378 = vmatpush2.bf16.msra.mxu0 0
  %379 = vmatprep.subr.bf16.mxu0 0
  %380 = vmatpush2.bf16.msra.mxu0 0
  %381 = vmatprep.subr.bf16.mxu0 0
  %382 = vmatpush2.bf16.msra.mxu0 0
  %383 = vmatprep.subr.bf16.mxu0 0
  %384 = vmatpush2.bf16.msra.mxu0 0
  %385 = vmatprep.subr.bf16.mxu0 0
  %386 = vmatpush2.bf16.msra.mxu0 0
  %387 = vmatprep.mubr.bf16.mxu0 0
  %388 = vmatmul.mubr.bf16.gmra.mxu0 %v353
  %v389 = vpop.f32.mrf.mxu0
  %v390 = vadd.f32 0.0, %v389
  %v391 = vpop.f32.mrf.mxu0
  %v392 = vpop.f32.mrf.mxu0
  %v393 = vadd.f32 0.0, %v392
  %v394 = vpop.f32.mrf.mxu0
  %395 = vdwg.mxu0
  %v396 = vrcp.pop %v390
  %v397 = vrcp.pop %v393
  %400 = vrot.lane.b32.xlu0 %v396, 96
  %v401 = vpop.permute.xlu0 %400
  %402 = vrot.lane.b32.xlu0 %v397, 96
  %v403 = vpop.permute.xlu0 %402
  %v406 = vmul.f32 %v390, %v401
  %v407 = vmul.f32 %v393, %v403
  %v408 = vpack.c.bf16 %v407, %v406
  %v409 = vld [vmem:[%s2 + $0x1] sm:$0x1]
  %v410 = vlaneseq
  %v411 = vshrl.u32 %v410, 7
  %v412 = vsub.s32 0, %v411
  %v413 = vrot.slane %v409, %v412
  %414 = vrot.lane.b32.xlu0 %v46, 32
  %v415 = vpop.permute.xlu0 %414
  %416 = vrot.lane.b32.xlu0 %v47, 32
  %v417 = vpop.permute.xlu0 %416
  %v421 = vsel %vm50, %v408, 0
  %423 = vmatprep.subr.bf16.mxu0 0
  %424 = vmatpush1.bf16.msra.mxu0 0
  %425 = vmatprep.subr.bf16.mxu0 0
  %426 = vmatpush1.bf16.msra.mxu0 0
  %427 = vmatprep.subr.bf16.mxu0 0
  %428 = vmatpush1.bf16.msra.mxu0 0
  %429 = vmatprep.subr.bf16.mxu0 0
  %430 = vmatpush1.bf16.msra.mxu0 0
  %431 = vmatprep.subr.bf16.mxu0 0
  %432 = vmatpush1.bf16.msra.mxu0 0
  %433 = vmatprep.subr.bf16.mxu0 0
  %434 = vmatpush1.bf16.msra.mxu0 0
  %435 = vmatprep.subr.bf16.mxu0 0
  %436 = vmatpush1.bf16.msra.mxu0 %v417
  %437 = vmatprep.subr.bf16.mxu0 0
  %438 = vmatpush1.bf16.msra.mxu0 %v415
  %439 = vmatprep.subr.bf16.mxu0 0
  %440 = vmatpush2.bf16.msra.mxu0 0
  %441 = vmatprep.subr.bf16.mxu0 0
  %442 = vmatpush2.bf16.msra.mxu0 0
  %443 = vmatprep.subr.bf16.mxu0 0
  %444 = vmatpush2.bf16.msra.mxu0 0
  %445 = vmatprep.subr.bf16.mxu0 0
  %446 = vmatpush2.bf16.msra.mxu0 0
  %447 = vmatprep.subr.bf16.mxu0 0
  %448 = vmatpush2.bf16.msra.mxu0 0
  %449 = vmatprep.subr.bf16.mxu0 0
  %450 = vmatpush2.bf16.msra.mxu0 0
  %451 = vmatprep.subr.bf16.mxu0 0
  %452 = vmatpush2.bf16.msra.mxu0 0
  %453 = vmatprep.subr.bf16.mxu0 0
  %454 = vmatpush2.bf16.msra.mxu0 0
  %455 = vmatprep.mubr.bf16.mxu0 0
  %456 = vmatmul.mubr.bf16.gmra.mxu0 %v421
  %v457 = vpop.f32.mrf.mxu0
  %v458 = vadd.f32 %v413, %v457
  %v459 = vpop.f32.mrf.mxu0
  %v460 = vpop.f32.mrf.mxu0
  %v461 = vadd.f32 %v413, %v460
  %v462 = vpop.f32.mrf.mxu0
  %463 = vdwg.mxu0
  %v464 = vadd.f32 %v24, %v458
  %v465 = vadd.f32 %v25, %v461
  %v466 = vld [vmem:[%s2 + $0x2] sm:$0x1]
  %v467 = vld [vmem:[%s2 + $0x3] sm:$0x1]
  %v468 = vsel %vm50, %v464, 0.0
  %469 = vadd.xlane.f32.xlu0 %v468
  %v470 = vpop.xlane.xlu0 %469
  %v471 = vsel %vm50, %v465, 0.0
  %472 = vadd.xlane.f32.xlu0 %v471
  %v473 = vpop.xlane.xlu0 %472
  %v474 = vrcp.pop 32.0
  %v475 = vmul.f32 %v470, %v474
  %v476 = vmul.f32 %v473, %v474
  %v477 = vsub.f32 %v464, %v475
  %v478 = vsub.f32 %v465, %v476
  %v479 = vmul.f32 %v477, %v477
  %v480 = vmul.f32 %v478, %v478
  %v481 = vsel %vm50, %v479, 0.0
  %482 = vadd.xlane.f32.xlu0 %v481
  %v483 = vpop.xlane.xlu0 %482
  %v484 = vsel %vm50, %v480, 0.0
  %485 = vadd.xlane.f32.xlu0 %v484
  %v486 = vpop.xlane.xlu0 %485
  %v487 = vmul.f32 %v483, 0.032258064
  %v488 = vmul.f32 %v486, 0.032258064
  %v489 = vrsqrt.pop %v487
  %v490 = vrsqrt.pop %v488
  %v491 = vmul.f32 %v489, 1e-06
  %v492 = vmul.f32 %v490, 1e-06
  %v493 = vsub.f32 1.0, %v491
  %v494 = vsub.f32 1.0, %v492
  %v495 = vmul.f32 %v489, %v493
  %v496 = vmul.f32 %v490, %v494
  %v497 = vmul.f32 %v477, %v495
  %v498 = vmul.f32 %v478, %v496
  %v499 = vlaneseq
  %v500 = vshrl.u32 %v499, 7
  %v501 = vsub.s32 0, %v500
  %v502 = vrot.slane %v466, %v501
  %v503 = vmul.f32 %v502, %v497
  %v504 = vmul.f32 %v502, %v498
  %v505 = vlaneseq
  %v506 = vshrl.u32 %v505, 7
  %v507 = vsub.s32 0, %v506
  %v508 = vrot.slane %v467, %v507
  %v509 = vadd.f32 %v503, %v508
  %v510 = vadd.f32 %v504, %v508
  %v511 = vpack.c.bf16 %v510, %v509
  %v512 = vld [vmem:[%s1 + $0x10] sm:$0xf]
  %v513 = vld [vmem:[%s1 + $0x14] sm:$0xf]
  %v514 = vld [vmem:[%s1 + $0x18] sm:$0xf]
  %v515 = vld [vmem:[%s1 + $0x1c] sm:$0xf]
  %v516 = vld [vmem:[%s2 + $0x4] sm:$0x1]
  %v517 = vlaneseq
  %v518 = vshrl.u32 %v517, 7
  %v519 = vsub.s32 0, %v518
  %v520 = vrot.slane %v516, %v519
  %v525 = vunpack.c.l.b16 %v512
  %v526 = vunpack.c.l.b16 %v513
  %v527 = vunpack.c.l.b16 %v514
  %v528 = vunpack.c.l.b16 %v515
  %v529 = vpack.c.b16 %v526, %v525
  %v530 = vpack.c.b16 %v528, %v527
  %v534 = vsel %vm50, %v511, 0
  %536 = vmatprep.subr.bf16.mxu0 0
  %537 = vmatpush1.bf16.msra.mxu0 0
  %538 = vmatprep.subr.bf16.mxu0 0
  %539 = vmatpush1.bf16.msra.mxu0 0
  %540 = vmatprep.subr.bf16.mxu0 0
  %541 = vmatpush1.bf16.msra.mxu0 0
  %542 = vmatprep.subr.bf16.mxu0 0
  %543 = vmatpush1.bf16.msra.mxu0 0
  %544 = vmatprep.subr.bf16.mxu0 0
  %545 = vmatpush1.bf16.msra.mxu0 0
  %546 = vmatprep.subr.bf16.mxu0 0
  %547 = vmatpush1.bf16.msra.mxu0 0
  %548 = vmatprep.subr.bf16.mxu0 0
  %549 = vmatpush1.bf16.msra.mxu0 %v530
  %550 = vmatprep.subr.bf16.mxu0 0
  %551 = vmatpush1.bf16.msra.mxu0 %v529
  %552 = vmatprep.subr.bf16.mxu0 0
  %553 = vmatpush2.bf16.msra.mxu0 0
  %554 = vmatprep.subr.bf16.mxu0 0
  %555 = vmatpush2.bf16.msra.mxu0 0
  %556 = vmatprep.subr.bf16.mxu0 0
  %557 = vmatpush2.bf16.msra.mxu0 0
  %558 = vmatprep.subr.bf16.mxu0 0
  %559 = vmatpush2.bf16.msra.mxu0 0
  %560 = vmatprep.subr.bf16.mxu0 0
  %561 = vmatpush2.bf16.msra.mxu0 0
  %562 = vmatprep.subr.bf16.mxu0 0
  %563 = vmatpush2.bf16.msra.mxu0 0
  %564 = vmatprep.subr.bf16.mxu0 0
  %565 = vmatpush2.bf16.msra.mxu0 0
  %566 = vmatprep.subr.bf16.mxu0 0
  %567 = vmatpush2.bf16.msra.mxu0 0
  %568 = vmatprep.mubr.bf16.mxu0 0
  %569 = vmatmul.mubr.bf16.gmra.mxu0 %v534
  %v570 = vpop.f32.mrf.mxu0
  %v571 = vadd.f32 %v520, %v570
  %v572 = vpop.f32.mrf.mxu0
  %v573 = vpop.f32.mrf.mxu0
  %v574 = vadd.f32 %v520, %v573
  %v575 = vpop.f32.mrf.mxu0
  %576 = vdwg.mxu0
  %v577 = vmax.f32 %v571, 0.0
  %v578 = vmax.f32 %v574, 0.0
  %v579 = vpack.c.bf16 %v578, %v577
  %v580 = vld [vmem:[%s1 + $0x20] sm:$0xf]
  %v581 = vld [vmem:[%s1 + $0x24] sm:$0xf]
  %v582 = vld [vmem:[%s1 + $0x28] sm:$0xf]
  %v583 = vld [vmem:[%s1 + $0x2c] sm:$0xf]
  %v584 = vld [vmem:[%s1 + $0x30] sm:$0xf]
  %v585 = vld [vmem:[%s1 + $0x34] sm:$0xf]
  %v586 = vld [vmem:[%s1 + $0x38] sm:$0xf]
  %v587 = vld [vmem:[%s1 + $0x3c] sm:$0xf]
  %v588 = vld [vmem:[%s2 + $0x5] sm:$0x1]
  %v589 = vlaneseq
  %v590 = vshrl.u32 %v589, 7
  %v591 = vsub.s32 0, %v590
  %v592 = vrot.slane %v588, %v591
  %v601 = vunpack.c.l.b16 %v580
  %v602 = vunpack.c.l.b16 %v581
  %v603 = vunpack.c.l.b16 %v582
  %v604 = vunpack.c.l.b16 %v583
  %v605 = vunpack.c.l.b16 %v584
  %v606 = vunpack.c.l.b16 %v585
  %v607 = vunpack.c.l.b16 %v586
  %v608 = vunpack.c.l.b16 %v587
  %v609 = vpack.c.b16 %v602, %v601
  %v610 = vpack.c.b16 %v604, %v603
  %v611 = vpack.c.b16 %v606, %v605
  %v612 = vpack.c.b16 %v608, %v607
  %v618 = vsel %vm334, %v579, 0
  %620 = vmatprep.subr.bf16.mxu0 0
  %621 = vmatpush1.bf16.msra.mxu0 0
  %622 = vmatprep.subr.bf16.mxu0 0
  %623 = vmatpush1.bf16.msra.mxu0 0
  %624 = vmatprep.subr.bf16.mxu0 0
  %625 = vmatpush1.bf16.msra.mxu0 0
  %626 = vmatprep.subr.bf16.mxu0 0
  %627 = vmatpush1.bf16.msra.mxu0 0
  %628 = vmatprep.subr.bf16.mxu0 0
  %629 = vmatpush1.bf16.msra.mxu0 %v612
  %630 = vmatprep.subr.bf16.mxu0 0
  %631 = vmatpush1.bf16.msra.mxu0 %v611
  %632 = vmatprep.subr.bf16.mxu0 0
  %633 = vmatpush1.bf16.msra.mxu0 %v610
  %634 = vmatprep.subr.bf16.mxu0 0
  %635 = vmatpush1.bf16.msra.mxu0 %v609
  %636 = vmatprep.subr.bf16.mxu0 0
  %637 = vmatpush2.bf16.msra.mxu0 0
  %638 = vmatprep.subr.bf16.mxu0 0
  %639 = vmatpush2.bf16.msra.mxu0 0
  %640 = vmatprep.subr.bf16.mxu0 0
  %641 = vmatpush2.bf16.msra.mxu0 0
  %642 = vmatprep.subr.bf16.mxu0 0
  %643 = vmatpush2.bf16.msra.mxu0 0
  %644 = vmatprep.subr.bf16.mxu0 0
  %645 = vmatpush2.bf16.msra.mxu0 0
  %646 = vmatprep.subr.bf16.mxu0 0
  %647 = vmatpush2.bf16.msra.mxu0 0
  %648 = vmatprep.subr.bf16.mxu0 0
  %649 = vmatpush2.bf16.msra.mxu0 0
  %650 = vmatprep.subr.bf16.mxu0 0
  %651 = vmatpush2.bf16.msra.mxu0 0
  %652 = vmatprep.mubr.bf16.mxu0 0
  %653 = vmatmul.mubr.bf16.gmra.mxu0 %v618
  %v654 = vpop.f32.mrf.mxu0
  %v655 = vadd.f32 %v592, %v654
  %v656 = vpop.f32.mrf.mxu0
  %v657 = vpop.f32.mrf.mxu0
  %v658 = vadd.f32 %v592, %v657
  %v659 = vpop.f32.mrf.mxu0
  %660 = vdwg.mxu0
  %v661 = vadd.f32 %v509, %v655
  %v662 = vadd.f32 %v510, %v658
  %v663 = vld [vmem:[%s2 + $0x6] sm:$0x1]
  %v664 = vld [vmem:[%s2 + $0x7] sm:$0x1]
  %v665 = vsel %vm50, %v661, 0.0
  %666 = vadd.xlane.f32.xlu0 %v665
  %v667 = vpop.xlane.xlu0 %666
  %v668 = vsel %vm50, %v662, 0.0
  %669 = vadd.xlane.f32.xlu0 %v668
  %v670 = vpop.xlane.xlu0 %669
  %v671 = vmul.f32 %v667, %v474
  %v672 = vmul.f32 %v670, %v474
  %v673 = vsub.f32 %v661, %v671
  %v674 = vsub.f32 %v662, %v672
  %v675 = vmul.f32 %v673, %v673
  %v676 = vmul.f32 %v674, %v674
  %v677 = vsel %vm50, %v675, 0.0
  %678 = vadd.xlane.f32.xlu0 %v677
  %v679 = vpop.xlane.xlu0 %678
  %v680 = vsel %vm50, %v676, 0.0
  %681 = vadd.xlane.f32.xlu0 %v680
  %v682 = vpop.xlane.xlu0 %681
  %v683 = vmul.f32 %v679, 0.032258064
  %v684 = vmul.f32 %v682, 0.032258064
  %v685 = vrsqrt.pop %v683
  %v686 = vrsqrt.pop %v684
  %v687 = vmul.f32 %v685, 1e-06
  %v688 = vmul.f32 %v686, 1e-06
  %v689 = vsub.f32 1.0, %v687
  %v690 = vsub.f32 1.0, %v688
  %v691 = vmul.f32 %v685, %v689
  %v692 = vmul.f32 %v686, %v690
  %v693 = vmul.f32 %v673, %v691
  %v694 = vmul.f32 %v674, %v692
  %v695 = vlaneseq
  %v696 = vshrl.u32 %v695, 7
  %v697 = vsub.s32 0, %v696
  %v698 = vrot.slane %v663, %v697
  %v699 = vmul.f32 %v698, %v693
  %v700 = vmul.f32 %v698, %v694
  %v701 = vlaneseq
  %v702 = vshrl.u32 %v701, 7
  %v703 = vsub.s32 0, %v702
  %v704 = vrot.slane %v664, %v703
  %v705 = vadd.f32 %v699, %v704
  %v706 = vadd.f32 %v700, %v704
  %707 = vst.msk [vmem:[#allocation2] sm:$0xff] %vm50, %v705
  %708 = vst.msk [vmem:[#allocation2 + $0x8] sm:$0xff] %vm50, %v706
  %710 = vrot.lane.b32.xlu0 %v706, 32
  %v711 = vpop.permute.xlu0 %710
  %714 = vrot.lane.b32.xlu0 %v705, 64
  %v715 = vpop.permute.xlu0 %714
  %717 = vrot.lane.b32.xlu0 %v706, 96
  %v718 = vpop.permute.xlu0 %717
  %v720 = vsel %vm50, %v705, %v711
  %v721 = vsel %vm334, %v720, %v715
  %vm722 = vcmask 785408
  %v723 = vsel %vm722, %v721, %v718
  %724 = vst [vmem:[%s3] sm:$0xff] %v723
  // Predicated region
  $region18: #{sa_forward.1} parent=0 // pred_check
    _
  $region19: #{sa_forward.1} parent=0 // pred_check_branch
    %726 = sbr.rel (0) target = $region21
  $region20: #{sa_forward.1} parent=0 // pred_region
    _
  $region21: #{sa_forward.1} parent=0 // pred_fallthru
    _
  // Predicated region
  $region22: #{sa_forward.1} parent=0 // pred_check
    _
  $region23: #{sa_forward.1} parent=0 // pred_check_branch
    %728 = sbr.rel (0) target = $region25
  $region24: #{sa_forward.1} parent=0 // pred_region
    _
  $region25: #{sa_forward.1} parent=0 // pred_fallthru
    _

</llo_original>
